<compile_context>
chip_gen: v7x
topology: tpu7x:2x2x1
jax: 0.10.0
libtpu: 0.0.40
codegen_flags: <defaults>
</compile_context>

<pallas_src>
import numpy as np
import jax
import jax.numpy as jnp
from jax.experimental import pallas as pl
from jax.experimental.pallas import tpu as pltpu


_SUB = 8  # sublane-group granularity for the in-kernel accumulation loop


def delta_kernel(w_ref, x_ref, o_ref):
    # w_ref: (L,) f32 in SMEM (scalar prefetch)
    # x_ref: (TB, L, TD) VMEM tile
    # o_ref: (TB, TD)    VMEM tile
    TB, L, _ = x_ref.shape

    def accumulate(r0, rows_n):
        # Chain every weighted term in registers; one store per sub-block.
        rows = pl.ds(r0, rows_n)
        acc = x_ref[rows, 0, :].astype(jnp.float32) * w_ref[0]
        if L <= 32:
            for l in range(1, L):
                acc = acc + x_ref[rows, l, :].astype(jnp.float32) * w_ref[l]
        else:
            def l_body(l, a):
                return a + x_ref[rows, l, :].astype(jnp.float32) * w_ref[l]
            acc = jax.lax.fori_loop(1, L, l_body, acc, unroll=8)
        o_ref[rows, :] = acc.astype(o_ref.dtype)

    n_full, rem = divmod(TB, _SUB)

    if n_full > 0:
        if n_full == 1:
            accumulate(0, _SUB)
        else:
            def sub_body(sb, carry):
                accumulate(pl.multiple_of(sb * _SUB, _SUB), _SUB)
                return carry
            jax.lax.fori_loop(0, n_full, sub_body, 0)
    if rem > 0:
        accumulate(n_full * _SUB, rem)


def _round_up(x, m):
    return ((x + m - 1) // m) * m


def _vmem_budgets():
    """Generation-aware (input-block budget, scoped-VMEM limit) in bytes."""
    vmem_cap = 64 * 1024 * 1024  # conservative default == v7x per-core VMEM
    try:
        cap = getattr(pltpu.get_tpu_info(), "vmem_capacity_bytes", None)
        if cap:
            vmem_cap = int(cap)
    except Exception:
        pass
    if vmem_cap <= 64 * 1024 * 1024:                  # v7x-class (64 MiB)
        return 8 * 1024 * 1024, 48 * 1024 * 1024
    return 16 * 1024 * 1024, 96 * 1024 * 1024         # v5e / v6e (128 MiB)


def _pick_td(D, cap=2048):
    """Lane tile: full D if modest, else the largest 128-multiple divisor <= cap."""
    if D <= cap:
        return D
    td = (cap // 128) * 128
    while td >= 128:
        if D % td == 0:
            return td
        td -= 128
    # No clean divisor: use a padded 128-multiple tile (last block is masked).
    return (cap // 128) * 128


def _choose_tiles(B, L, D, in_itemsize, out_itemsize, block_budget, vmem_limit):
    # Sub-32-bit dtypes pack along sublanes -> the L axis of a (tb, L, td)
    # block gets padded in VMEM; budget with the padded size.
    sublane_rows = 8 * max(1, 4 // in_itemsize)       # 8 (f32), 16 (bf16), 32 (int8)
    padded_L = _round_up(L, sublane_rows)

    td = _pick_td(D)
    row_bytes = max(1, padded_L * td * in_itemsize)

    tb_cap = max(1, block_budget // row_bytes)
    if tb_cap >= B:
        tb = B
    else:
        tb = min(B, max(_SUB, (tb_cap // _SUB) * _SUB))

    # Never collapse to a single block when the batch is splittable: megacore
    # sharding ("parallel") and DMA/compute overlap need >= 2 (ideally >= 8)
    # blocks.
    if tb >= B and td >= D and B >= 2 * _SUB:
        n_blk = min(8, B // _SUB)
        tb = max(_SUB, _round_up(-(-B // n_blk), _SUB))

    # Hard guard: double-buffered input + output blocks must fit the scoped
    # limit with headroom for Mosaic internal scratch.
    def footprint(tb_, td_):
        return (2 * tb_ * padded_L * td_ * in_itemsize
                + 2 * tb_ * td_ * out_itemsize)

    headroom = (3 * vmem_limit) // 4
    while footprint(tb, td) > headroom and tb > _SUB:
        tb = max(_SUB, ((tb // 2) // _SUB) * _SUB)
    while footprint(tb, td) > headroom and td >= 256 and td % 256 == 0:
        td //= 2
    return tb, td


def delta_forward(x, weight):
    """x: (B, seqL, inDims), weight: (seqL,) -> (B, inDims)."""
    B, L, D = x.shape
    in_itemsize = jnp.dtype(x.dtype).itemsize
    out_itemsize = in_itemsize
    block_budget, vmem_limit = _vmem_budgets()
    tb, td = _choose_tiles(B, L, D, in_itemsize, out_itemsize,
                           block_budget, vmem_limit)

    grid = (pl.cdiv(B, tb), pl.cdiv(D, td))

    # TODO(synk): for bf16/int8 inputs a flattened (B*L, D) layout with strided
    # row loads would additionally avoid sublane-unpack shuffles; the padded-L
    # VMEM footprint is already accounted for in _choose_tiles.
    grid_spec = pltpu.PrefetchScalarGridSpec(
        num_scalar_prefetch=1,   # weight -> SMEM; visible to index_maps + kernel
        grid=grid,
        in_specs=[pl.BlockSpec((tb, L, td), lambda i, j, w: (i, 0, j))],
        out_specs=pl.BlockSpec((tb, td), lambda i, j, w: (i, j)),
    )

    cost = pl.CostEstimate(
        flops=2 * B * L * D,
        transcendentals=0,
        bytes_accessed=B * L * D * in_itemsize + B * D * out_itemsize + L * 4,
    )

    return pl.pallas_call(
        delta_kernel,
        out_shape=jax.ShapeDtypeStruct((B, D), x.dtype),
        grid_spec=grid_spec,
        compiler_params=pltpu.CompilerParams(
            dimension_semantics=("parallel", "parallel"),
            vmem_limit_bytes=vmem_limit,
        ),
        cost_estimate=cost,
    )(weight.astype(jnp.float32), x)


def make_delta_weight(seqL):
    # Matches Delta.__init__: ones / (seqL/2), first half negated.
    w = np.ones(seqL, np.float32) / (seqL / 2.0)
    w[: seqL // 2] *= -1
    return jnp.asarray(w)


if __name__ == "__main__":
    B, seqL, inDims = 2, 8, 32

    key = jax.random.PRNGKey(0)
    x = jax.random.normal(key, (B, seqL, inDims), dtype=jnp.float32)
    w = make_delta_weight(seqL)

    out = delta_forward(x, w)
    out = jax.block_until_ready(out)

    # Pure-JAX reference of the PyTorch forward.
    ref = jnp.einsum("bld,l->bd", x, w)
    assert out.shape == (B, inDims)
    assert np.allclose(np.asarray(out), np.asarray(ref), atol=1e-5, rtol=1e-5)

    print("KERNEL_OK")
</pallas_src>

<mosaic_0001>
module attributes {stable_mosaic.version = 11 : i64} {
  func.func @delta_kernel(%arg0: i32, %arg1: i32, %arg2: memref<8xf32, #tpu.memory_space<smem>>, %arg3: memref<2x8x32xf32, #tpu.memory_space<vmem>>, %arg4: memref<2x32xf32, #tpu.memory_space<vmem>>) attributes {dimension_semantics = [#tpu.dimension_semantics<parallel>, #tpu.dimension_semantics<parallel>], iteration_bounds = array<i64: 1, 1>, scalar_prefetch = 1 : i64, scratch_operands = 0 : i64, tpu.core_type = #tpu.core_type<tc>, window_params = [{transform_indices = @transform_0, window_bounds = array<i64: 2, 8, 32>}, {transform_indices = @transform_1, window_bounds = array<i64: 2, 32>}]} {
    %c0 = arith.constant 0 : index
    %c0_0 = arith.constant 0 : index
    %c0_1 = arith.constant 0 : index
    %0 = vector.load %arg3[%c0, %c0_0, %c0_1] : memref<2x8x32xf32, #tpu.memory_space<vmem>>, vector<2x1x32xf32>
    %1 = vector.shape_cast %0 : vector<2x1x32xf32> to vector<2x32xf32>
    %c0_2 = arith.constant 0 : index
    %2 = memref.load %arg2[%c0_2] : memref<8xf32, #tpu.memory_space<smem>>
    %3 = vector.broadcast %2 : f32 to vector<2x32xf32>
    %4 = arith.mulf %1, %3 : vector<2x32xf32>
    %c0_3 = arith.constant 0 : index
    %c1 = arith.constant 1 : index
    %c0_4 = arith.constant 0 : index
    %5 = vector.load %arg3[%c0_3, %c1, %c0_4] : memref<2x8x32xf32, #tpu.memory_space<vmem>>, vector<2x1x32xf32>
    %6 = vector.shape_cast %5 : vector<2x1x32xf32> to vector<2x32xf32>
    %c1_5 = arith.constant 1 : index
    %7 = memref.load %arg2[%c1_5] : memref<8xf32, #tpu.memory_space<smem>>
    %8 = vector.broadcast %7 : f32 to vector<2x32xf32>
    %9 = arith.mulf %6, %8 : vector<2x32xf32>
    %10 = arith.addf %4, %9 : vector<2x32xf32>
    %c0_6 = arith.constant 0 : index
    %c2 = arith.constant 2 : index
    %c0_7 = arith.constant 0 : index
    %11 = vector.load %arg3[%c0_6, %c2, %c0_7] : memref<2x8x32xf32, #tpu.memory_space<vmem>>, vector<2x1x32xf32>
    %12 = vector.shape_cast %11 : vector<2x1x32xf32> to vector<2x32xf32>
    %c2_8 = arith.constant 2 : index
    %13 = memref.load %arg2[%c2_8] : memref<8xf32, #tpu.memory_space<smem>>
    %14 = vector.broadcast %13 : f32 to vector<2x32xf32>
    %15 = arith.mulf %12, %14 : vector<2x32xf32>
    %16 = arith.addf %10, %15 : vector<2x32xf32>
    %c0_9 = arith.constant 0 : index
    %c3 = arith.constant 3 : index
    %c0_10 = arith.constant 0 : index
    %17 = vector.load %arg3[%c0_9, %c3, %c0_10] : memref<2x8x32xf32, #tpu.memory_space<vmem>>, vector<2x1x32xf32>
    %18 = vector.shape_cast %17 : vector<2x1x32xf32> to vector<2x32xf32>
    %c3_11 = arith.constant 3 : index
    %19 = memref.load %arg2[%c3_11] : memref<8xf32, #tpu.memory_space<smem>>
    %20 = vector.broadcast %19 : f32 to vector<2x32xf32>
    %21 = arith.mulf %18, %20 : vector<2x32xf32>
    %22 = arith.addf %16, %21 : vector<2x32xf32>
    %c0_12 = arith.constant 0 : index
    %c4 = arith.constant 4 : index
    %c0_13 = arith.constant 0 : index
    %23 = vector.load %arg3[%c0_12, %c4, %c0_13] : memref<2x8x32xf32, #tpu.memory_space<vmem>>, vector<2x1x32xf32>
    %24 = vector.shape_cast %23 : vector<2x1x32xf32> to vector<2x32xf32>
    %c4_14 = arith.constant 4 : index
    %25 = memref.load %arg2[%c4_14] : memref<8xf32, #tpu.memory_space<smem>>
    %26 = vector.broadcast %25 : f32 to vector<2x32xf32>
    %27 = arith.mulf %24, %26 : vector<2x32xf32>
    %28 = arith.addf %22, %27 : vector<2x32xf32>
    %c0_15 = arith.constant 0 : index
    %c5 = arith.constant 5 : index
    %c0_16 = arith.constant 0 : index
    %29 = vector.load %arg3[%c0_15, %c5, %c0_16] : memref<2x8x32xf32, #tpu.memory_space<vmem>>, vector<2x1x32xf32>
    %30 = vector.shape_cast %29 : vector<2x1x32xf32> to vector<2x32xf32>
    %c5_17 = arith.constant 5 : index
    %31 = memref.load %arg2[%c5_17] : memref<8xf32, #tpu.memory_space<smem>>
    %32 = vector.broadcast %31 : f32 to vector<2x32xf32>
    %33 = arith.mulf %30, %32 : vector<2x32xf32>
    %34 = arith.addf %28, %33 : vector<2x32xf32>
    %c0_18 = arith.constant 0 : index
    %c6 = arith.constant 6 : index
    %c0_19 = arith.constant 0 : index
    %35 = vector.load %arg3[%c0_18, %c6, %c0_19] : memref<2x8x32xf32, #tpu.memory_space<vmem>>, vector<2x1x32xf32>
    %36 = vector.shape_cast %35 : vector<2x1x32xf32> to vector<2x32xf32>
    %c6_20 = arith.constant 6 : index
    %37 = memref.load %arg2[%c6_20] : memref<8xf32, #tpu.memory_space<smem>>
    %38 = vector.broadcast %37 : f32 to vector<2x32xf32>
    %39 = arith.mulf %36, %38 : vector<2x32xf32>
    %40 = arith.addf %34, %39 : vector<2x32xf32>
    %c0_21 = arith.constant 0 : index
    %c7 = arith.constant 7 : index
    %c0_22 = arith.constant 0 : index
    %41 = vector.load %arg3[%c0_21, %c7, %c0_22] : memref<2x8x32xf32, #tpu.memory_space<vmem>>, vector<2x1x32xf32>
    %42 = vector.shape_cast %41 : vector<2x1x32xf32> to vector<2x32xf32>
    %c7_23 = arith.constant 7 : index
    %43 = memref.load %arg2[%c7_23] : memref<8xf32, #tpu.memory_space<smem>>
    %44 = vector.broadcast %43 : f32 to vector<2x32xf32>
    %45 = arith.mulf %42, %44 : vector<2x32xf32>
    %46 = arith.addf %40, %45 : vector<2x32xf32>
    %c0_24 = arith.constant 0 : index
    %c0_25 = arith.constant 0 : index
    %47 = vector.load %arg4[%c0_24, %c0_25] : memref<2x32xf32, #tpu.memory_space<vmem>>, vector<2x32xf32>
    tpu.vector_store %arg4[%c0_24, %c0_25], %46 {strides = array<i32>} : memref<2x32xf32, #tpu.memory_space<vmem>>, vector<2x32xf32>,
    return
  }
  func.func @transform_0(%arg0: i32, %arg1: i32, %arg2: memref<8xf32, #tpu.memory_space<smem>>) -> (i32, i32, i32) {
    %c0_i32 = arith.constant 0 : i32
    %c0_i32_0 = arith.constant 0 : i32
    return %arg0, %c0_i32, %arg1 : i32, i32, i32
  }
  func.func @transform_1(%arg0: i32, %arg1: i32, %arg2: memref<8xf32, #tpu.memory_space<smem>>) -> (i32, i32) {
    %c0_i32 = arith.constant 0 : i32
    return %arg0, %arg1 : i32, i32
  }
}

</mosaic_0001>

<llo_original>
// kernel: tpu_custom_call.1
$region0: #{tpu_custom_call.1}
  #allocation0 [shape = 'u32[]', space=smem, size = 0x4, offset = 0x4, fixed_abs, tag = 'smem constant byte address 0x4 - core index']
  #allocation1 [shape = 'u32[144,128]{1,0:T(1,128)}', space=vmem, size = 0x12000, scoped, tag = 'internal scratch']
  #allocation2 [shape = 's32[1]{0}', space=sflag, size = 0x4, scoped, tag = 'scoped memory for tpu_custom_call.1']
  #allocation3 [shape = 'u8[512]{0}', space=smem, size = 0x200, scoped, tag = 'prefetched SMEM operand 0']
  %s0 = inlined_call_operand.hbm [shape: f32[8], index: 0, kind: input, shape index: {}]
  %s1 = inlined_call_operand.hbm [shape: f32[2,8,32], index: 1, kind: input, shape index: {}]
  %s2 = inlined_call_operand.hbm [shape: f32[2,32], index: 2, kind: output, shape index: {}]
  %s3 = sld [smem:[#allocation0]]
  $region18: #{tpu_custom_call.1} parent=0
    _
  %s5 = ssub.s32 1, %s3
  %s6 = scalar_select 0, %s5, %s3
  %8 = dma.hbm_to_smem %s0, 16, [#allocation3], [#allocation2]
  %9 = dma.done [#allocation2], 16
  %10 = sfence
  $region1: #{tpu_custom_call.1} parent=0
    #allocation4 [shape = 'u8[8192]{0}', space=vmem, size = 0x2000, scoped, tag = 'input window, operand 1, single buffered']
    #allocation5 [shape = 's32[1]{0}', space=sflag, size = 0x4, scoped, tag = 'scoped memory for tpu_custom_call.1']
    #allocation6 [shape = 's32[1]{0}', space=sflag, size = 0x4, scoped, tag = 'scoped memory for tpu_custom_call.1']
    #allocation7 [shape = 'u8[1024]{0}', space=vmem, size = 0x400, scoped, tag = 'output window, operand 0, single buffered']
    %11 = vsyncpa [#allocation5], 0
    %12 = vsyncpa [#allocation6], 0
    // Predicated region
    $region2: #{tpu_custom_call.1} parent=1 // pred_check
      _
    $region3: #{tpu_custom_call.1} parent=1 // pred_check_branch
      %14 = sbr.rel (0) target = $region5
    $region4: #{tpu_custom_call.1} parent=1 // pred_region
      %s16 = ssub.s32 256, 256
      %17 = vsyncadd [#allocation5], %s16
      %s18 = sshll.u32 [#allocation4], 4
      %s19 = int_to_ptr.vmem [resolvable:$true] %s18
      %24 = dma.hbm_to_vmem [thread:$0]  %s1, 256, %s19, [#allocation5], 128, 128, 8
    $region5: #{tpu_custom_call.1} parent=1 // pred_fallthru
      _
    // Predicated region
    $region6: #{tpu_custom_call.1} parent=1 // pred_check
      _
    $region7: #{tpu_custom_call.1} parent=1 // pred_check_branch
      %26 = sbr.rel (0) target = $region9
    $region8: #{tpu_custom_call.1} parent=1 // pred_region
      %27 = dma.done [#allocation5], 256
    $region9: #{tpu_custom_call.1} parent=1 // pred_fallthru
      _
    %v28 = vld [vmem:[#allocation4] sm:$0x1]
    %v29 = vld [vmem:[#allocation4 + $0x8] sm:$0x1]
    %s30 = sld [smem:[#allocation3]]
    %v31 = vstv %s30
    %v32 = vmul.f32 %v28, %v31
    %v33 = vmul.f32 %v29, %v31
    %v34 = vld [vmem:[#allocation4 + $0x1] sm:$0x1]
    %v35 = vld [vmem:[#allocation4 + $0x9] sm:$0x1]
    %s36 = sld [smem:[#allocation3 + $0x1]]
    %v37 = vstv %s36
    %v38 = vmul.f32 %v34, %v37
    %v39 = vmul.f32 %v35, %v37
    %v40 = vadd.f32 %v32, %v38
    %v41 = vadd.f32 %v33, %v39
    %v42 = vld [vmem:[#allocation4 + $0x2] sm:$0x1]
    %v43 = vld [vmem:[#allocation4 + $0xa] sm:$0x1]
    %s44 = sld [smem:[#allocation3 + $0x2]]
    %v45 = vstv %s44
    %v46 = vmul.f32 %v42, %v45
    %v47 = vmul.f32 %v43, %v45
    %v48 = vadd.f32 %v40, %v46
    %v49 = vadd.f32 %v41, %v47
    %v50 = vld [vmem:[#allocation4 + $0x3] sm:$0x1]
    %v51 = vld [vmem:[#allocation4 + $0xb] sm:$0x1]
    %s52 = sld [smem:[#allocation3 + $0x3]]
    %v53 = vstv %s52
    %v54 = vmul.f32 %v50, %v53
    %v55 = vmul.f32 %v51, %v53
    %v56 = vadd.f32 %v48, %v54
    %v57 = vadd.f32 %v49, %v55
    %v58 = vld [vmem:[#allocation4 + $0x4] sm:$0x1]
    %v59 = vld [vmem:[#allocation4 + $0xc] sm:$0x1]
    %s60 = sld [smem:[#allocation3 + $0x4]]
    %v61 = vstv %s60
    %v62 = vmul.f32 %v58, %v61
    %v63 = vmul.f32 %v59, %v61
    %v64 = vadd.f32 %v56, %v62
    %v65 = vadd.f32 %v57, %v63
    %v66 = vld [vmem:[#allocation4 + $0x5] sm:$0x1]
    %v67 = vld [vmem:[#allocation4 + $0xd] sm:$0x1]
    %s68 = sld [smem:[#allocation3 + $0x5]]
    %v69 = vstv %s68
    %v70 = vmul.f32 %v66, %v69
    %v71 = vmul.f32 %v67, %v69
    %v72 = vadd.f32 %v64, %v70
    %v73 = vadd.f32 %v65, %v71
    %v74 = vld [vmem:[#allocation4 + $0x6] sm:$0x1]
    %v75 = vld [vmem:[#allocation4 + $0xe] sm:$0x1]
    %s76 = sld [smem:[#allocation3 + $0x6]]
    %v77 = vstv %s76
    %v78 = vmul.f32 %v74, %v77
    %v79 = vmul.f32 %v75, %v77
    %v80 = vadd.f32 %v72, %v78
    %v81 = vadd.f32 %v73, %v79
    %v82 = vld [vmem:[#allocation4 + $0x7] sm:$0x1]
    %v83 = vld [vmem:[#allocation4 + $0xf] sm:$0x1]
    %s84 = sld [smem:[#allocation3 + $0x7]]
    %v85 = vstv %s84
    %v86 = vmul.f32 %v82, %v85
    %v87 = vmul.f32 %v83, %v85
    %v88 = vadd.f32 %v80, %v86
    %v89 = vadd.f32 %v81, %v87
    %v92 = vrot.slane %v89, 7
    %vm93 = vcmask 1041409
    %v94 = vsel %vm93, %v92, %v88
    %vm96 = vcmask 254976
    %97 = vst.msk [vmem:[#allocation7] sm:$0x3] %vm96, %v94
    // Predicated region
    $region10: #{tpu_custom_call.1} parent=1 // pred_check
      _
    $region11: #{tpu_custom_call.1} parent=1 // pred_check_branch
      %99 = sbr.rel (0) target = $region13
    $region12: #{tpu_custom_call.1} parent=1 // pred_region
      %s101 = ssub.s32 32, 32
      %102 = vsyncadd [#allocation6], %s101
      %s104 = sshll.u32 [#allocation7], 4
      %s105 = int_to_ptr.vmem [resolvable:$true] %s104
      %107 = dma.vmem_to_hbm [thread:$0]  %s105, 32, %s2, [#allocation6]
    $region13: #{tpu_custom_call.1} parent=1 // pred_fallthru
      _
    // Predicated region
    $region14: #{tpu_custom_call.1} parent=1 // pred_check
      _
    $region15: #{tpu_custom_call.1} parent=1 // pred_check_branch
      %109 = sbr.rel (0) target = $region17
    $region16: #{tpu_custom_call.1} parent=1 // pred_region
      %110 = dma.done [#allocation6], 32
    $region17: #{tpu_custom_call.1} parent=1 // pred_fallthru
      _
    %111 = vsyncpa [#allocation5], 1
    %112 = vsyncpa [#allocation6], 1

</llo_original>
